<compile_context>
chip_gen: v5e
topology: v5e:2x2
jax: 0.10.0
libtpu: 0.0.40
codegen_flags: <defaults>
</compile_context>

<pallas_src>
import jax
import jax.numpy as jnp
from jax.experimental import pallas as pl
from jax.experimental.pallas import tpu as pltpu


def _round_up(x, m):
    return (x + m - 1) // m * m


def _directional_sums(t_l, t_c, t_r, m_l, m_r, b_l, b_c, b_r):
    """3-neighbour sums P_f for the 8 Kirsch directions (order: na..nea).

    Each Kirsch response is r_f = 8*P_f - 3*S (S = sum of all 8 ring neighbours),
    so argmax/argmin over r_f equals argmax/argmin over P_f.
    Shared by the kernel and the pure-JAX reference so summation order is identical.
    """
    return [
        (t_r + m_r) + b_r,   # na  : right column
        (t_c + t_r) + m_r,   # nwa
        (t_l + t_c) + t_r,   # wa  : top row
        (t_l + t_c) + m_l,   # swa
        (t_l + m_l) + b_l,   # sa  : left column
        (m_l + b_l) + b_c,   # sea
        (b_l + b_c) + b_r,   # ea  : bottom row
        (m_r + b_c) + b_r,   # nea
    ]


def _kirsch_kernel(x_main_ref, x_halo_ref, out_ref, xbuf_ref):
    # x_main_ref: (TILE_H, Wi) f32   rows [i*TILE_H, (i+1)*TILE_H) of padded image
    # x_halo_ref: (8, Wi)      f32   rows [(i+1)*TILE_H, (i+1)*TILE_H + 8)
    # out_ref   : (TILE_H, Wo) int32
    # xbuf_ref  : (TILE_H + 8, Wi) f32 VMEM scratch (contiguous tile + halo)
    th, _ = x_main_ref.shape
    wo = out_ref.shape[1]

    # Assemble contiguous slab: body rows then halo rows (both 8-aligned stores).
    xbuf_ref[0:th, :] = x_main_ref[...]
    xbuf_ref[th:th + 8, :] = x_halo_ref[...]

    # Three lane(column)-shifted slabs, materialized once (col offsets 0, 1, 2).
    c0 = xbuf_ref[:, 0:wo]
    c1 = xbuf_ref[:, 1:1 + wo]
    c2 = xbuf_ref[:, 2:2 + wo]

    # 8 ring-neighbour windows as sublane-offset slices (row offsets 0, 1, 2).
    t_l, t_c, t_r = c0[0:th], c1[0:th], c2[0:th]
    m_l, m_r = c0[1:th + 1], c2[1:th + 1]
    b_l, b_c, b_r = c0[2:th + 2], c1[2:th + 2], c2[2:th + 2]

    p = _directional_sums(t_l, t_c, t_r, m_l, m_r, b_l, b_c, b_r)

    # Running argmax / argmin over the 8 directions (strict compare keeps the
    # first occurrence, matching torch.argmax / torch.argmin).
    max_val = p[0]
    min_val = p[0]
    max_idx = jnp.zeros(p[0].shape, jnp.int32)
    min_idx = jnp.zeros(p[0].shape, jnp.int32)
    for f in range(1, 8):
        gt = p[f] > max_val
        max_val = jnp.where(gt, p[f], max_val)
        max_idx = jnp.where(gt, jnp.int32(f), max_idx)
        lt = p[f] < min_val
        min_val = jnp.where(lt, p[f], min_val)
        min_idx = jnp.where(lt, jnp.int32(f), min_idx)

    out_ref[...] = 8 * max_idx + min_idx


def _choose_tile_h(H, Wi):
    """Largest multiple-of-8 row tile with a ~1 MiB f32 input buffer, capped at 512."""
    target = 1 << 20
    th = max(8, min(512, (target // (Wi * 4)) // 8 * 8))
    return min(th, _round_up(H, 8))


def kirsch_mask(img, *, tile_h=None):
    """JAX/Pallas equivalent of kirsch_mask_model.forward.

    img: (H, W) float  ->  (H, W) int32  (= 8*argmax_dir + argmin_dir)
    """
    img = img.astype(jnp.float32)
    H, W = img.shape

    Wo = _round_up(W, 128)          # lane-dense output width
    Wi = Wo + 2                     # +2 column halo (zero 'same' padding)
    if tile_h is None:
        tile_h = _choose_tile_h(H, Wi)
    assert tile_h % 8 == 0 and tile_h >= 8
    Ho = _round_up(H, tile_h)
    Hi = Ho + tile_h                # room for the 8-row bottom halo; multiple of tile_h
    n_tiles = Ho // tile_h
    halo_stride = tile_h // 8       # halo block index step (block rows of 8)

    # Zero padding: image at rows 1..H, cols 1..W of the (Hi, Wi) slab.
    xp = jnp.pad(img, ((1, Hi - H - 1), (1, Wi - W - 1)))

    out = pl.pallas_call(
        _kirsch_kernel,
        out_shape=jax.ShapeDtypeStruct((Ho, Wo), jnp.int32),
        grid_spec=pltpu.PrefetchScalarGridSpec(
            num_scalar_prefetch=0,
            grid=(n_tiles,),
            in_specs=[
                # Body rows of the tile.
                pl.BlockSpec((tile_h, Wi), lambda i: (i, 0)),
                # 8 rows immediately below the tile (2 of them are the row halo).
                pl.BlockSpec((8, Wi), lambda i: ((i + 1) * halo_stride, 0)),
            ],
            out_specs=pl.BlockSpec((tile_h, Wo), lambda i: (i, 0)),
            scratch_shapes=[pltpu.VMEM((tile_h + 8, Wi), jnp.float32)],
        ),
        compiler_params=pltpu.CompilerParams(
            dimension_semantics=("parallel",),
            vmem_limit_bytes=32 * 1024 * 1024,
        ),
    )(xp, xp)

    return out[:H, :W]


def _reference(img):
    """Pure-JAX reference (same summation order as the kernel)."""
    img = img.astype(jnp.float32)
    H, W = img.shape
    xp = jnp.pad(img, ((1, 1), (1, 1)))

    def w(di, dj):
        return xp[di:di + H, dj:dj + W]

    p = _directional_sums(w(0, 0), w(0, 1), w(0, 2),
                          w(1, 0), w(1, 2),
                          w(2, 0), w(2, 1), w(2, 2))
    x = jnp.stack(p, axis=-1)   # (H, W, 8)
    return (8 * jnp.argmax(x, axis=2) + jnp.argmin(x, axis=2)).astype(jnp.int32)


if __name__ == "__main__":
    key = jax.random.PRNGKey(0)
    k1, k2 = jax.random.split(key)

    # Primary check: small image consistent with the module (single tile).
    H, W = 16, 16
    img = jax.random.normal(k1, (H, W), dtype=jnp.float32)
    out = jax.block_until_ready(kirsch_mask(img))
    assert out.shape == (H, W) and out.dtype == jnp.int32
    assert bool(jnp.all(out == _reference(img)))

    # Secondary check: multi-tile grid exercising the row-halo path.
    H2, W2 = 40, 72
    img2 = jax.random.normal(k2, (H2, W2), dtype=jnp.float32)
    out2 = jax.block_until_ready(kirsch_mask(img2, tile_h=8))
    assert out2.shape == (H2, W2)
    assert bool(jnp.all(out2 == _reference(img2)))

    print("KERNEL_OK")
</pallas_src>

<mosaic_0001>
module attributes {stable_mosaic.version = 11 : i64} {
  func.func @_kirsch_kernel(%arg0: i32, %arg1: memref<16x130xf32, #tpu.memory_space<vmem>>, %arg2: memref<8x130xf32, #tpu.memory_space<vmem>>, %arg3: memref<16x128xi32, #tpu.memory_space<vmem>>, %arg4: memref<24x130xf32, #tpu.memory_space<vmem>>) attributes {dimension_semantics = [#tpu.dimension_semantics<parallel>], iteration_bounds = array<i64: 1>, scalar_prefetch = 0 : i64, scratch_operands = 1 : i64, tpu.core_type = #tpu.core_type<tc>, window_params = [{transform_indices = @transform_0, window_bounds = array<i64: 16, 130>}, {transform_indices = @transform_1, window_bounds = array<i64: 8, 130>}, {transform_indices = @transform_2, window_bounds = array<i64: 16, 128>}]} {
    %c0 = arith.constant 0 : index
    %c0_0 = arith.constant 0 : index
    %0 = vector.load %arg1[%c0, %c0_0] : memref<16x130xf32, #tpu.memory_space<vmem>>, vector<16x130xf32>
    %c0_1 = arith.constant 0 : index
    %c0_2 = arith.constant 0 : index
    %1 = vector.load %arg4[%c0_1, %c0_2] : memref<24x130xf32, #tpu.memory_space<vmem>>, vector<16x130xf32>
    tpu.vector_store %arg4[%c0_1, %c0_2], %0 {strides = array<i32>} : memref<24x130xf32, #tpu.memory_space<vmem>>, vector<16x130xf32>,
    %c0_3 = arith.constant 0 : index
    %c0_4 = arith.constant 0 : index
    %2 = vector.load %arg2[%c0_3, %c0_4] : memref<8x130xf32, #tpu.memory_space<vmem>>, vector<8x130xf32>
    %c16 = arith.constant 16 : index
    %c0_5 = arith.constant 0 : index
    %3 = vector.load %arg4[%c16, %c0_5] : memref<24x130xf32, #tpu.memory_space<vmem>>, vector<8x130xf32>
    tpu.vector_store %arg4[%c16, %c0_5], %2 {strides = array<i32>} : memref<24x130xf32, #tpu.memory_space<vmem>>, vector<8x130xf32>,
    %c0_6 = arith.constant 0 : index
    %c0_7 = arith.constant 0 : index
    %4 = vector.load %arg4[%c0_6, %c0_7] : memref<24x130xf32, #tpu.memory_space<vmem>>, vector<24x128xf32>
    %c0_8 = arith.constant 0 : index
    %c1 = arith.constant 1 : index
    %5 = vector.load %arg4[%c0_8, %c1] : memref<24x130xf32, #tpu.memory_space<vmem>>, vector<24x128xf32>
    %c0_9 = arith.constant 0 : index
    %c2 = arith.constant 2 : index
    %6 = vector.load %arg4[%c0_9, %c2] : memref<24x130xf32, #tpu.memory_space<vmem>>, vector<24x128xf32>
    %7 = vector.extract_strided_slice %4 {offsets = [0, 0], sizes = [16, 128], strides = [1, 1]} : vector<24x128xf32> to vector<16x128xf32>
    %8 = vector.extract_strided_slice %5 {offsets = [0, 0], sizes = [16, 128], strides = [1, 1]} : vector<24x128xf32> to vector<16x128xf32>
    %9 = vector.extract_strided_slice %6 {offsets = [0, 0], sizes = [16, 128], strides = [1, 1]} : vector<24x128xf32> to vector<16x128xf32>
    %10 = vector.extract_strided_slice %4 {offsets = [1, 0], sizes = [16, 128], strides = [1, 1]} : vector<24x128xf32> to vector<16x128xf32>
    %11 = vector.extract_strided_slice %6 {offsets = [1, 0], sizes = [16, 128], strides = [1, 1]} : vector<24x128xf32> to vector<16x128xf32>
    %12 = vector.extract_strided_slice %4 {offsets = [2, 0], sizes = [16, 128], strides = [1, 1]} : vector<24x128xf32> to vector<16x128xf32>
    %13 = vector.extract_strided_slice %5 {offsets = [2, 0], sizes = [16, 128], strides = [1, 1]} : vector<24x128xf32> to vector<16x128xf32>
    %14 = vector.extract_strided_slice %6 {offsets = [2, 0], sizes = [16, 128], strides = [1, 1]} : vector<24x128xf32> to vector<16x128xf32>
    %15 = arith.addf %9, %11 : vector<16x128xf32>
    %16 = arith.addf %15, %14 : vector<16x128xf32>
    %17 = arith.addf %8, %9 : vector<16x128xf32>
    %18 = arith.addf %17, %11 : vector<16x128xf32>
    %19 = arith.addf %7, %8 : vector<16x128xf32>
    %20 = arith.addf %19, %9 : vector<16x128xf32>
    %21 = arith.addf %7, %8 : vector<16x128xf32>
    %22 = arith.addf %21, %10 : vector<16x128xf32>
    %23 = arith.addf %7, %10 : vector<16x128xf32>
    %24 = arith.addf %23, %12 : vector<16x128xf32>
    %25 = arith.addf %10, %12 : vector<16x128xf32>
    %26 = arith.addf %25, %13 : vector<16x128xf32>
    %27 = arith.addf %12, %13 : vector<16x128xf32>
    %28 = arith.addf %27, %14 : vector<16x128xf32>
    %29 = arith.addf %11, %13 : vector<16x128xf32>
    %30 = arith.addf %29, %14 : vector<16x128xf32>
    %c0_i32 = arith.constant 0 : i32
    %31 = vector.broadcast %c0_i32 : i32 to vector<16x128xi32>
    %c0_i32_10 = arith.constant 0 : i32
    %32 = vector.broadcast %c0_i32_10 : i32 to vector<16x128xi32>
    %33 = arith.cmpf ogt, %18, %16 : vector<16x128xf32>
    %34 = arith.select %33, %18, %16 : vector<16x128xi1>, vector<16x128xf32>
    %c1_i32 = arith.constant 1 : i32
    %35 = vector.broadcast %c1_i32 : i32 to vector<16x128xi32>
    %36 = arith.select %33, %35, %31 : vector<16x128xi1>, vector<16x128xi32>
    %37 = arith.cmpf olt, %18, %16 : vector<16x128xf32>
    %38 = arith.select %37, %18, %16 : vector<16x128xi1>, vector<16x128xf32>
    %c1_i32_11 = arith.constant 1 : i32
    %39 = vector.broadcast %c1_i32_11 : i32 to vector<16x128xi32>
    %40 = arith.select %37, %39, %32 : vector<16x128xi1>, vector<16x128xi32>
    %41 = arith.cmpf ogt, %20, %34 : vector<16x128xf32>
    %42 = arith.select %41, %20, %34 : vector<16x128xi1>, vector<16x128xf32>
    %c2_i32 = arith.constant 2 : i32
    %43 = vector.broadcast %c2_i32 : i32 to vector<16x128xi32>
    %44 = arith.select %41, %43, %36 : vector<16x128xi1>, vector<16x128xi32>
    %45 = arith.cmpf olt, %20, %38 : vector<16x128xf32>
    %46 = arith.select %45, %20, %38 : vector<16x128xi1>, vector<16x128xf32>
    %c2_i32_12 = arith.constant 2 : i32
    %47 = vector.broadcast %c2_i32_12 : i32 to vector<16x128xi32>
    %48 = arith.select %45, %47, %40 : vector<16x128xi1>, vector<16x128xi32>
    %49 = arith.cmpf ogt, %22, %42 : vector<16x128xf32>
    %50 = arith.select %49, %22, %42 : vector<16x128xi1>, vector<16x128xf32>
    %c3_i32 = arith.constant 3 : i32
    %51 = vector.broadcast %c3_i32 : i32 to vector<16x128xi32>
    %52 = arith.select %49, %51, %44 : vector<16x128xi1>, vector<16x128xi32>
    %53 = arith.cmpf olt, %22, %46 : vector<16x128xf32>
    %54 = arith.select %53, %22, %46 : vector<16x128xi1>, vector<16x128xf32>
    %c3_i32_13 = arith.constant 3 : i32
    %55 = vector.broadcast %c3_i32_13 : i32 to vector<16x128xi32>
    %56 = arith.select %53, %55, %48 : vector<16x128xi1>, vector<16x128xi32>
    %57 = arith.cmpf ogt, %24, %50 : vector<16x128xf32>
    %58 = arith.select %57, %24, %50 : vector<16x128xi1>, vector<16x128xf32>
    %c4_i32 = arith.constant 4 : i32
    %59 = vector.broadcast %c4_i32 : i32 to vector<16x128xi32>
    %60 = arith.select %57, %59, %52 : vector<16x128xi1>, vector<16x128xi32>
    %61 = arith.cmpf olt, %24, %54 : vector<16x128xf32>
    %62 = arith.select %61, %24, %54 : vector<16x128xi1>, vector<16x128xf32>
    %c4_i32_14 = arith.constant 4 : i32
    %63 = vector.broadcast %c4_i32_14 : i32 to vector<16x128xi32>
    %64 = arith.select %61, %63, %56 : vector<16x128xi1>, vector<16x128xi32>
    %65 = arith.cmpf ogt, %26, %58 : vector<16x128xf32>
    %66 = arith.select %65, %26, %58 : vector<16x128xi1>, vector<16x128xf32>
    %c5_i32 = arith.constant 5 : i32
    %67 = vector.broadcast %c5_i32 : i32 to vector<16x128xi32>
    %68 = arith.select %65, %67, %60 : vector<16x128xi1>, vector<16x128xi32>
    %69 = arith.cmpf olt, %26, %62 : vector<16x128xf32>
    %70 = arith.select %69, %26, %62 : vector<16x128xi1>, vector<16x128xf32>
    %c5_i32_15 = arith.constant 5 : i32
    %71 = vector.broadcast %c5_i32_15 : i32 to vector<16x128xi32>
    %72 = arith.select %69, %71, %64 : vector<16x128xi1>, vector<16x128xi32>
    %73 = arith.cmpf ogt, %28, %66 : vector<16x128xf32>
    %74 = arith.select %73, %28, %66 : vector<16x128xi1>, vector<16x128xf32>
    %c6_i32 = arith.constant 6 : i32
    %75 = vector.broadcast %c6_i32 : i32 to vector<16x128xi32>
    %76 = arith.select %73, %75, %68 : vector<16x128xi1>, vector<16x128xi32>
    %77 = arith.cmpf olt, %28, %70 : vector<16x128xf32>
    %78 = arith.select %77, %28, %70 : vector<16x128xi1>, vector<16x128xf32>
    %c6_i32_16 = arith.constant 6 : i32
    %79 = vector.broadcast %c6_i32_16 : i32 to vector<16x128xi32>
    %80 = arith.select %77, %79, %72 : vector<16x128xi1>, vector<16x128xi32>
    %81 = arith.cmpf ogt, %30, %74 : vector<16x128xf32>
    %c7_i32 = arith.constant 7 : i32
    %82 = vector.broadcast %c7_i32 : i32 to vector<16x128xi32>
    %83 = arith.select %81, %82, %76 : vector<16x128xi1>, vector<16x128xi32>
    %84 = arith.cmpf olt, %30, %78 : vector<16x128xf32>
    %c7_i32_17 = arith.constant 7 : i32
    %85 = vector.broadcast %c7_i32_17 : i32 to vector<16x128xi32>
    %86 = arith.select %84, %85, %80 : vector<16x128xi1>, vector<16x128xi32>
    %c8_i32 = arith.constant 8 : i32
    %87 = vector.broadcast %c8_i32 : i32 to vector<16x128xi32>
    %88 = arith.muli %87, %83 : vector<16x128xi32>
    %89 = arith.addi %88, %86 : vector<16x128xi32>
    %c0_18 = arith.constant 0 : index
    %c0_19 = arith.constant 0 : index
    %90 = vector.load %arg3[%c0_18, %c0_19] : memref<16x128xi32, #tpu.memory_space<vmem>>, vector<16x128xi32>
    tpu.vector_store %arg3[%c0_18, %c0_19], %89 {strides = array<i32>} : memref<16x128xi32, #tpu.memory_space<vmem>>, vector<16x128xi32>,
    return
  }
  func.func @transform_0(%arg0: i32) -> (i32, i32) {
    %c0_i32 = arith.constant 0 : i32
    %c0_i32_0 = arith.constant 0 : i32
    return %arg0, %c0_i32 : i32, i32
  }
  func.func @transform_1(%arg0: i32) -> (i32, i32) {
    %c1_i32 = arith.constant 1 : i32
    %0 = arith.addi %arg0, %c1_i32 : i32
    %c2_i32 = arith.constant 2 : i32
    %1 = arith.muli %0, %c2_i32 : i32
    %c0_i32 = arith.constant 0 : i32
    %c0_i32_0 = arith.constant 0 : i32
    return %1, %c0_i32 : i32, i32
  }
  func.func @transform_2(%arg0: i32) -> (i32, i32) {
    %c0_i32 = arith.constant 0 : i32
    %c0_i32_0 = arith.constant 0 : i32
    return %arg0, %c0_i32 : i32, i32
  }
}

</mosaic_0001>

<llo_original>
// kernel: tpu_custom_call.1
$region0: #{tpu_custom_call.1}
  #allocation0 [shape = 'u32[]', space=smem, size = 0x4, offset = 0x4, fixed_abs, tag = 'smem constant byte address 0x4 - core index']
  #allocation1 [shape = 'u32[72,128]{1,0:T(1,128)}', space=vmem, size = 0x9000, scoped, tag = 'internal scratch']
  #allocation2 [shape = 'f32[24,130]{1,0:T(8,128)}', space=vmem, size = 0x6000, scoped, tag = 'scratch operand']
  %s0 = inlined_call_operand.hbm [shape: f32[32,130], index: 0, kind: input, shape index: {}]
  %s1 = inlined_call_operand.hbm [shape: f32[32,130], index: 1, kind: input, shape index: {}]
  %s2 = inlined_call_operand.hbm [shape: s32[16,128], index: 2, kind: output, shape index: {}]
  %s3 = sld [smem:[#allocation0]]
  $region26: #{tpu_custom_call.1} parent=0
    _
  %s5 = ssub.s32 1, %s3
  %s6 = scalar_select 0, %s5, %s3
  $region1: #{tpu_custom_call.1} parent=0
    #allocation3 [shape = 'u8[16384]{0}', space=vmem, size = 0x4000, scoped, tag = 'input window, operand 0, single buffered']
    #allocation4 [shape = 's32[1]{0}', space=sflag, size = 0x4, scoped, tag = 'scoped memory for tpu_custom_call.1']
    #allocation5 [shape = 's32[1]{0}', space=sflag, size = 0x4, scoped, tag = 'scoped memory for tpu_custom_call.1']
    #allocation6 [shape = 'u8[8192]{0}', space=vmem, size = 0x2000, scoped, tag = 'input window, operand 1, single buffered']
    #allocation7 [shape = 's32[1]{0}', space=sflag, size = 0x4, scoped, tag = 'scoped memory for tpu_custom_call.1']
    #allocation8 [shape = 'u8[8192]{0}', space=vmem, size = 0x2000, scoped, tag = 'output window, operand 0, single buffered']
    %7 = vsyncpa [#allocation4], 0
    %8 = vsyncpa [#allocation7], 0
    %9 = vsyncpa [#allocation5], 0
    // Predicated region
    $region2: #{tpu_custom_call.1} parent=1 // pred_check
      _
    $region3: #{tpu_custom_call.1} parent=1 // pred_check_branch
      %11 = sbr.rel (0) target = $region5
    $region4: #{tpu_custom_call.1} parent=1 // pred_region
      %13 = vsyncadd [#allocation4], 0
      %s14 = sshll.u32 %s0, 4
      %s15 = int_to_ptr.hbm [resolvable:$true] %s14
      %s16 = sshll.u32 [#allocation3], 4
      %s17 = int_to_ptr.vmem [resolvable:$true] %s16
      %22 = dma.hbm_to_vmem [thread:$0]  %s15, 512, %s17, [#allocation4], 256, 256, 16
    $region5: #{tpu_custom_call.1} parent=1 // pred_fallthru
      _
    // Predicated region
    $region6: #{tpu_custom_call.1} parent=1 // pred_check
      _
    $region7: #{tpu_custom_call.1} parent=1 // pred_check_branch
      %24 = sbr.rel (0) target = $region9
    $region8: #{tpu_custom_call.1} parent=1 // pred_region
      %s25 = sadd.s32 0, 1
      %s26 = smul.u32 %s25, 2
      %28 = vsyncadd [#allocation7], 0
      %s29 = smul.addr %s26, 2
      %s30 = smul.addr %s29, 8
      %s31 = scalar_lea.hbm %s1, %s30
      %s33 = sshll.u32 %s31, 4
      %s34 = int_to_ptr.hbm [resolvable:$true] %s33
      %s35 = sshll.u32 [#allocation6], 4
      %s36 = int_to_ptr.vmem [resolvable:$true] %s35
      %38 = dma.hbm_to_vmem [thread:$0]  %s34, 256, %s36, [#allocation7]
    $region9: #{tpu_custom_call.1} parent=1 // pred_fallthru
      _
    // Predicated region
    $region10: #{tpu_custom_call.1} parent=1 // pred_check
      _
    $region11: #{tpu_custom_call.1} parent=1 // pred_check_branch
      %40 = sbr.rel (0) target = $region13
    $region12: #{tpu_custom_call.1} parent=1 // pred_region
      %42 = dma.done [#allocation4], 512
    $region13: #{tpu_custom_call.1} parent=1 // pred_fallthru
      _
    // Predicated region
    $region14: #{tpu_custom_call.1} parent=1 // pred_check
      _
    $region15: #{tpu_custom_call.1} parent=1 // pred_check_branch
      %44 = sbr.rel (0) target = $region17
    $region16: #{tpu_custom_call.1} parent=1 // pred_region
      %46 = dma.done [#allocation7], 256
    $region17: #{tpu_custom_call.1} parent=1 // pred_fallthru
      _
    %s47 = sadd.s32 0, 1
    %s48 = smul.u32 %s47, 2
    %v49 = vld [vmem:[#allocation3] sm:$0xff]
    %v50 = vld [vmem:[#allocation3 + $0x8] sm:$0xff]
    %v51 = vld [vmem:[#allocation3 + $0x10] sm:$0xff]
    %v52 = vld [vmem:[#allocation3 + $0x18] sm:$0xff]
    %53 = vst [vmem:[#allocation2] sm:$0xff] %v49
    %vm54 = vcmask 15360
    %55 = vst.msk [vmem:[#allocation2 + $0x8] sm:$0xff] %vm54, %v50
    %56 = vst [vmem:[#allocation2 + $0x10] sm:$0xff] %v51
    %57 = vst.msk [vmem:[#allocation2 + $0x18] sm:$0xff] %vm54, %v52
    %v58 = vld [vmem:[#allocation6] sm:$0xff]
    %v59 = vld [vmem:[#allocation6 + $0x8] sm:$0xff]
    %60 = vst [vmem:[#allocation2 + $0x20] sm:$0xff] %v58
    %61 = vst.msk [vmem:[#allocation2 + $0x28] sm:$0xff] %vm54, %v59
    %v62 = vld [vmem:[#allocation2] sm:$0xff]
    %v63 = vld [vmem:[#allocation2 + $0x10] sm:$0xff]
    %v64 = vld [vmem:[#allocation2 + $0x20] sm:$0xff]
    %v65 = vld [vmem:[#allocation2 + $0x8] sm:$0xff]
    %v66 = vld [vmem:[#allocation2 + $0x18] sm:$0xff]
    %v67 = vld [vmem:[#allocation2 + $0x28] sm:$0xff]
    %vm74 = vcmask 1046528
    %v75 = vrot.slane %v62, 1
    %v76 = vrot.slane %v63, 1
    %v77 = vsel %vm74, %v75, %v76
    %v78 = vrot.slane %v65, 1
    %v79 = vrot.slane %v66, 1
    %v80 = vsel %vm74, %v78, %v79
    %v81 = vrot.slane %v64, 1
    %v82 = vsel %vm74, %v76, %v81
    %v83 = vrot.slane %v67, 1
    %v84 = vsel %vm74, %v79, %v83
    %v89 = vadd.f32 %v62, %v77
    %v90 = vadd.f32 %v65, %v80
    %v91 = vadd.f32 %v63, %v82
    %v92 = vadd.f32 %v66, %v84
    %vm93 = vcmask 1045504
    %v94 = vrot.slane %v62, 2
    %v95 = vrot.slane %v63, 2
    %v96 = vsel %vm93, %v94, %v95
    %v97 = vrot.slane %v65, 2
    %v98 = vrot.slane %v66, 2
    %v99 = vsel %vm93, %v97, %v98
    %v100 = vrot.slane %v64, 2
    %v101 = vsel %vm93, %v95, %v100
    %v102 = vrot.slane %v67, 2
    %v103 = vsel %vm93, %v98, %v102
    %v108 = vadd.f32 %v89, %v96
    %v109 = vadd.f32 %v90, %v99
    %v110 = vadd.f32 %v91, %v101
    %v111 = vadd.f32 %v92, %v103
    %112 = vrot.lane.b32.xlu0 %v62, 127
    %v113 = vpop.permute.xlu0 %112
    %114 = vrot.lane.b32.xlu0 %v65, 127
    %v115 = vpop.permute.xlu0 %114
    %116 = vrot.lane.b32.xlu0 %v63, 127
    %v117 = vpop.permute.xlu0 %116
    %118 = vrot.lane.b32.xlu0 %v66, 127
    %v119 = vpop.permute.xlu0 %118
    %vm120 = vcmask 1039360
    %v121 = vsel %vm120, %v113, %v115
    %v122 = vsel %vm120, %v117, %v119
    %v127 = vadd.f32 %v62, %v121
    %v128 = vadd.f32 %v65, %v115
    %v129 = vadd.f32 %v63, %v122
    %v130 = vadd.f32 %v66, %v119
    %131 = vrot.lane.b32.xlu0 %v77, 127
    %v132 = vpop.permute.xlu0 %131
    %133 = vrot.lane.b32.xlu0 %v80, 127
    %v134 = vpop.permute.xlu0 %133
    %135 = vrot.lane.b32.xlu0 %v82, 127
    %v136 = vpop.permute.xlu0 %135
    %137 = vrot.lane.b32.xlu0 %v84, 127
    %v138 = vpop.permute.xlu0 %137
    %v139 = vsel %vm120, %v132, %v134
    %v140 = vsel %vm120, %v136, %v138
    %v145 = vadd.f32 %v127, %v139
    %v146 = vadd.f32 %v128, %v134
    %v147 = vadd.f32 %v129, %v140
    %v148 = vadd.f32 %v130, %v138
    %149 = vrot.lane.b32.xlu0 %v62, 126
    %v150 = vpop.permute.xlu0 %149
    %151 = vrot.lane.b32.xlu0 %v65, 126
    %v152 = vpop.permute.xlu0 %151
    %153 = vrot.lane.b32.xlu0 %v63, 126
    %v154 = vpop.permute.xlu0 %153
    %155 = vrot.lane.b32.xlu0 %v66, 126
    %v156 = vpop.permute.xlu0 %155
    %vm157 = vcmask 1031168
    %v158 = vsel %vm157, %v150, %v152
    %v159 = vsel %vm157, %v154, %v156
    %v162 = vadd.f32 %v127, %v158
    %v163 = vadd.f32 %v129, %v159
    %v164 = vadd.f32 %v127, %v77
    %v165 = vadd.f32 %v129, %v82
    %v167 = vadd.f32 %v64, %v81
    %168 = vrot.lane.b32.xlu0 %v81, 127
    %v169 = vpop.permute.xlu0 %168
    %170 = vrot.lane.b32.xlu0 %v83, 127
    %v171 = vpop.permute.xlu0 %170
    %v172 = vsel %vm120, %v169, %v171
    %v174 = vadd.f32 %v89, %v139
    %v175 = vadd.f32 %v91, %v140
    %v176 = vadd.f32 %v167, %v172
    %177 = vrot.lane.b32.xlu0 %v64, 127
    %v178 = vpop.permute.xlu0 %177
    %179 = vrot.lane.b32.xlu0 %v67, 127
    %v180 = vpop.permute.xlu0 %179
    %v181 = vsel %vm120, %v178, %v180
    %v183 = vadd.f32 %v64, %v181
    %184 = vrot.lane.b32.xlu0 %v64, 126
    %v185 = vpop.permute.xlu0 %184
    %186 = vrot.lane.b32.xlu0 %v67, 126
    %v187 = vpop.permute.xlu0 %186
    %v188 = vsel %vm157, %v185, %v187
    %v190 = vadd.f32 %v183, %v188
    %191 = vrot.lane.b32.xlu0 %v77, 1
    %v192 = vpop.permute.xlu0 %191
    %193 = vrot.lane.b32.xlu0 %v80, 1
    %v194 = vpop.permute.xlu0 %193
    %195 = vrot.lane.b32.xlu0 %v82, 1
    %v196 = vpop.permute.xlu0 %195
    %197 = vrot.lane.b32.xlu0 %v84, 1
    %v198 = vpop.permute.xlu0 %197
    %199 = vrot.lane.b32.xlu0 %v81, 1
    %v200 = vpop.permute.xlu0 %199
    %201 = vrot.lane.b32.xlu0 %v83, 1
    %v202 = vpop.permute.xlu0 %201
    %vm203 = vcmask 7168
    %v204 = vsel %vm203, %v192, %v194
    %v205 = vsel %vm203, %v196, %v198
    %v206 = vsel %vm203, %v200, %v202
    %v213 = vadd.f32 %v62, %v192
    %v214 = vadd.f32 %v65, %v204
    %v215 = vadd.f32 %v63, %v196
    %v216 = vadd.f32 %v66, %v205
    %v217 = vadd.f32 %v64, %v200
    %v218 = vadd.f32 %v67, %v206
    %v220 = vadd.f32 %v213, %v77
    %v221 = vadd.f32 %v214, %v80
    %v222 = vadd.f32 %v215, %v82
    %v223 = vadd.f32 %v216, %v84
    %v224 = vadd.f32 %v217, %v81
    %v225 = vadd.f32 %v218, %v83
    %230 = vrot.lane.b32.xlu0 %v108, 127
    %v231 = vpop.permute.xlu0 %230
    %232 = vrot.lane.b32.xlu0 %v109, 127
    %v233 = vpop.permute.xlu0 %232
    %234 = vrot.lane.b32.xlu0 %v110, 127
    %v235 = vpop.permute.xlu0 %234
    %236 = vrot.lane.b32.xlu0 %v111, 127
    %v237 = vpop.permute.xlu0 %236
    %v238 = vsel %vm120, %v231, %v233
    %v239 = vsel %vm120, %v235, %v237
    %vm244 = vcmp.gt.f32.partialorder %v145, %v238
    %vm245 = vcmp.gt.f32.partialorder %v146, %v233
    %vm246 = vcmp.gt.f32.partialorder %v147, %v239
    %vm247 = vcmp.gt.f32.partialorder %v148, %v237
    %v248 = vsel %vm244, %v145, %v238
    %v249 = vsel %vm245, %v146, %v233
    %v250 = vsel %vm246, %v147, %v239
    %v251 = vsel %vm247, %v148, %v237
    %v252 = vsel %vm244, 1, 0
    %v253 = vsel %vm245, 1, 0
    %v254 = vsel %vm246, 1, 0
    %v255 = vsel %vm247, 1, 0
    %vm256 = vcmp.lt.f32.partialorder %v145, %v238
    %vm257 = vcmp.lt.f32.partialorder %v146, %v233
    %vm258 = vcmp.lt.f32.partialorder %v147, %v239
    %vm259 = vcmp.lt.f32.partialorder %v148, %v237
    %v260 = vsel %vm256, %v145, %v238
    %v261 = vsel %vm257, %v146, %v233
    %v262 = vsel %vm258, %v147, %v239
    %v263 = vsel %vm259, %v148, %v237
    %v264 = vsel %vm256, 1, 0
    %v265 = vsel %vm257, 1, 0
    %v266 = vsel %vm258, 1, 0
    %v267 = vsel %vm259, 1, 0
    %272 = vrot.lane.b32.xlu0 %v248, 127
    %v273 = vpop.permute.xlu0 %272
    %274 = vrot.lane.b32.xlu0 %v249, 127
    %v275 = vpop.permute.xlu0 %274
    %276 = vrot.lane.b32.xlu0 %v250, 127
    %v277 = vpop.permute.xlu0 %276
    %278 = vrot.lane.b32.xlu0 %v251, 127
    %v279 = vpop.permute.xlu0 %278
    %v280 = vsel %vm120, %v273, %v275
    %v281 = vsel %vm120, %v277, %v279
    %vm284 = vcmp.gt.f32.partialorder %v162, %v280
    %vm285 = vcmp.gt.f32.partialorder %v163, %v281
    %v286 = vsel %vm284, %v162, %v280
    %v287 = vsel %vm285, %v163, %v281
    %288 = vrot.lane.b32.xlu0 %v252, 127
    %v289 = vpop.permute.xlu0 %288
    %290 = vrot.lane.b32.xlu0 %v253, 127
    %v291 = vpop.permute.xlu0 %290
    %292 = vrot.lane.b32.xlu0 %v254, 127
    %v293 = vpop.permute.xlu0 %292
    %294 = vrot.lane.b32.xlu0 %v255, 127
    %v295 = vpop.permute.xlu0 %294
    %v296 = vsel %vm120, %v289, %v291
    %v297 = vsel %vm120, %v293, %v295
    %v298 = vsel %vm284, 2, %v296
    %v299 = vsel %vm285, 2, %v297
    %304 = vrot.lane.b32.xlu0 %v260, 127
    %v305 = vpop.permute.xlu0 %304
    %306 = vrot.lane.b32.xlu0 %v261, 127
    %v307 = vpop.permute.xlu0 %306
    %308 = vrot.lane.b32.xlu0 %v262, 127
    %v309 = vpop.permute.xlu0 %308
    %310 = vrot.lane.b32.xlu0 %v263, 127
    %v311 = vpop.permute.xlu0 %310
    %v312 = vsel %vm120, %v305, %v307
    %v313 = vsel %vm120, %v309, %v311
    %vm316 = vcmp.lt.f32.partialorder %v162, %v312
    %vm317 = vcmp.lt.f32.partialorder %v163, %v313
    %v318 = vsel %vm316, %v162, %v312
    %v319 = vsel %vm317, %v163, %v313
    %320 = vrot.lane.b32.xlu0 %v264, 127
    %v321 = vpop.permute.xlu0 %320
    %322 = vrot.lane.b32.xlu0 %v265, 127
    %v323 = vpop.permute.xlu0 %322
    %324 = vrot.lane.b32.xlu0 %v266, 127
    %v325 = vpop.permute.xlu0 %324
    %326 = vrot.lane.b32.xlu0 %v267, 127
    %v327 = vpop.permute.xlu0 %326
    %v328 = vsel %vm120, %v321, %v323
    %v329 = vsel %vm120, %v325, %v327
    %v330 = vsel %vm316, 2, %v328
    %v331 = vsel %vm317, 2, %v329
    %vm332 = vcmp.gt.f32.partialorder %v164, %v286
    %vm333 = vcmp.gt.f32.partialorder %v165, %v287
    %v334 = vsel %vm332, %v164, %v286
    %v335 = vsel %vm333, %v165, %v287
    %v336 = vsel %vm332, 3, %v298
    %v337 = vsel %vm333, 3, %v299
    %vm338 = vcmp.lt.f32.partialorder %v164, %v318
    %vm339 = vcmp.lt.f32.partialorder %v165, %v319
    %v340 = vsel %vm338, %v164, %v318
    %v341 = vsel %vm339, %v165, %v319
    %v342 = vsel %vm338, 3, %v330
    %v343 = vsel %vm339, 3, %v331
    %vm344 = vcmp.gt.f32.partialorder %v108, %v334
    %vm345 = vcmp.gt.f32.partialorder %v110, %v335
    %v346 = vsel %vm344, %v108, %v334
    %v347 = vsel %vm345, %v110, %v335
    %v348 = vsel %vm344, 4, %v336
    %v349 = vsel %vm345, 4, %v337
    %vm350 = vcmp.lt.f32.partialorder %v108, %v340
    %vm351 = vcmp.lt.f32.partialorder %v110, %v341
    %v352 = vsel %vm350, %v108, %v340
    %v353 = vsel %vm351, %v110, %v341
    %v354 = vsel %vm350, 4, %v342
    %v355 = vsel %vm351, 4, %v343
    %vm358 = vcmask 1040384
    %v359 = vrot.slane %v346, 7
    %v360 = vrot.slane %v347, 7
    %v361 = vsel %vm358, %v359, %v360
    %vm365 = vcmp.gt.f32.partialorder %v174, %v359
    %vm366 = vcmp.gt.f32.partialorder %v175, %v361
    %vm367 = vcmp.gt.f32.partialorder %v176, %v360
    %v368 = vsel %vm365, %v174, %v359
    %v369 = vsel %vm366, %v175, %v361
    %v370 = vsel %vm367, %v176, %v360
    %v371 = vrot.slane %v348, 7
    %v372 = vrot.slane %v349, 7
    %v373 = vsel %vm358, %v371, %v372
    %v374 = vsel %vm365, 5, %v371
    %v375 = vsel %vm366, 5, %v373
    %v376 = vsel %vm367, 5, %v372
    %v379 = vrot.slane %v352, 7
    %v380 = vrot.slane %v353, 7
    %v381 = vsel %vm358, %v379, %v380
    %vm385 = vcmp.lt.f32.partialorder %v174, %v379
    %vm386 = vcmp.lt.f32.partialorder %v175, %v381
    %vm387 = vcmp.lt.f32.partialorder %v176, %v380
    %v388 = vsel %vm385, %v174, %v379
    %v389 = vsel %vm386, %v175, %v381
    %v390 = vsel %vm387, %v176, %v380
    %v391 = vrot.slane %v354, 7
    %v392 = vrot.slane %v355, 7
    %v393 = vsel %vm358, %v391, %v392
    %v394 = vsel %vm385, 5, %v391
    %v395 = vsel %vm386, 5, %v393
    %v396 = vsel %vm387, 5, %v392
    %v400 = vrot.slane %v368, 7
    %v401 = vrot.slane %v369, 7
    %v402 = vsel %vm358, %v400, %v401
    %v403 = vrot.slane %v370, 7
    %v404 = vsel %vm358, %v401, %v403
    %vm408 = vcmp.gt.f32.partialorder %v162, %v400
    %vm409 = vcmp.gt.f32.partialorder %v163, %v402
    %vm410 = vcmp.gt.f32.partialorder %v190, %v404
    %v411 = vsel %vm408, %v162, %v400
    %v412 = vsel %vm409, %v163, %v402
    %v413 = vsel %vm410, %v190, %v404
    %v414 = vrot.slane %v374, 7
    %v415 = vrot.slane %v375, 7
    %v416 = vsel %vm358, %v414, %v415
    %v417 = vrot.slane %v376, 7
    %v418 = vsel %vm358, %v415, %v417
    %v419 = vsel %vm408, 6, %v414
    %v420 = vsel %vm409, 6, %v416
    %v421 = vsel %vm410, 6, %v418
    %v425 = vrot.slane %v388, 7
    %v426 = vrot.slane %v389, 7
    %v427 = vsel %vm358, %v425, %v426
    %v428 = vrot.slane %v390, 7
    %v429 = vsel %vm358, %v426, %v428
    %vm433 = vcmp.lt.f32.partialorder %v162, %v425
    %vm434 = vcmp.lt.f32.partialorder %v163, %v427
    %vm435 = vcmp.lt.f32.partialorder %v190, %v429
    %v436 = vsel %vm433, %v162, %v425
    %v437 = vsel %vm434, %v163, %v427
    %v438 = vsel %vm435, %v190, %v429
    %v439 = vrot.slane %v394, 7
    %v440 = vrot.slane %v395, 7
    %v441 = vsel %vm358, %v439, %v440
    %v442 = vrot.slane %v396, 7
    %v443 = vsel %vm358, %v440, %v442
    %v444 = vsel %vm433, 6, %v439
    %v445 = vsel %vm434, 6, %v441
    %v446 = vsel %vm435, 6, %v443
    %v450 = vrot.slane %v411, 1
    %v451 = vrot.slane %v412, 1
    %v452 = vsel %vm74, %v450, %v451
    %v453 = vrot.slane %v413, 1
    %v454 = vsel %vm74, %v451, %v453
    %455 = vrot.lane.b32.xlu0 %v452, 2
    %v456 = vpop.permute.xlu0 %455
    %457 = vrot.lane.b32.xlu0 %v454, 2
    %v458 = vpop.permute.xlu0 %457
    %459 = vrot.lane.b32.xlu0 %v453, 2
    %v460 = vpop.permute.xlu0 %459
    %vm464 = vcmp.gt.f32.partialorder %v220, %v456
    %vm465 = vcmp.gt.f32.partialorder %v221, %v456
    %vm466 = vcmp.gt.f32.partialorder %v222, %v458
    %vm467 = vcmp.gt.f32.partialorder %v223, %v458
    %vm468 = vcmp.gt.f32.partialorder %v224, %v460
    %vm469 = vcmp.gt.f32.partialorder %v225, %v460
    %v470 = vrot.slane %v419, 1
    %v471 = vrot.slane %v420, 1
    %v472 = vsel %vm74, %v470, %v471
    %v473 = vrot.slane %v421, 1
    %v474 = vsel %vm74, %v471, %v473
    %475 = vrot.lane.b32.xlu0 %v472, 2
    %v476 = vpop.permute.xlu0 %475
    %477 = vrot.lane.b32.xlu0 %v474, 2
    %v478 = vpop.permute.xlu0 %477
    %479 = vrot.lane.b32.xlu0 %v473, 2
    %v480 = vpop.permute.xlu0 %479
    %v481 = vsel %vm464, 7, %v476
    %v482 = vsel %vm465, 7, %v476
    %v483 = vsel %vm466, 7, %v478
    %v484 = vsel %vm467, 7, %v478
    %v485 = vsel %vm468, 7, %v480
    %v486 = vsel %vm469, 7, %v480
    %v490 = vrot.slane %v436, 1
    %v491 = vrot.slane %v437, 1
    %v492 = vsel %vm74, %v490, %v491
    %v493 = vrot.slane %v438, 1
    %v494 = vsel %vm74, %v491, %v493
    %495 = vrot.lane.b32.xlu0 %v492, 2
    %v496 = vpop.permute.xlu0 %495
    %497 = vrot.lane.b32.xlu0 %v494, 2
    %v498 = vpop.permute.xlu0 %497
    %499 = vrot.lane.b32.xlu0 %v493, 2
    %v500 = vpop.permute.xlu0 %499
    %vm504 = vcmp.lt.f32.partialorder %v220, %v496
    %vm505 = vcmp.lt.f32.partialorder %v221, %v496
    %vm506 = vcmp.lt.f32.partialorder %v222, %v498
    %vm507 = vcmp.lt.f32.partialorder %v223, %v498
    %vm508 = vcmp.lt.f32.partialorder %v224, %v500
    %vm509 = vcmp.lt.f32.partialorder %v225, %v500
    %v510 = vrot.slane %v444, 1
    %v511 = vrot.slane %v445, 1
    %v512 = vsel %vm74, %v510, %v511
    %v513 = vrot.slane %v446, 1
    %v514 = vsel %vm74, %v511, %v513
    %515 = vrot.lane.b32.xlu0 %v512, 2
    %v516 = vpop.permute.xlu0 %515
    %517 = vrot.lane.b32.xlu0 %v514, 2
    %v518 = vpop.permute.xlu0 %517
    %519 = vrot.lane.b32.xlu0 %v513, 2
    %v520 = vpop.permute.xlu0 %519
    %v521 = vsel %vm504, 7, %v516
    %v522 = vsel %vm505, 7, %v516
    %v523 = vsel %vm506, 7, %v518
    %v524 = vsel %vm507, 7, %v518
    %v525 = vsel %vm508, 7, %v520
    %v526 = vsel %vm509, 7, %v520
    %v527 = vmul.u32 %v481, 8
    %v528 = vmul.u32 %v482, 8
    %v529 = vmul.u32 %v483, 8
    %v530 = vmul.u32 %v484, 8
    %v531 = vmul.u32 %v485, 8
    %v532 = vmul.u32 %v486, 8
    %v533 = vadd.s32 %v527, %v521
    %v534 = vadd.s32 %v528, %v522
    %v535 = vadd.s32 %v529, %v523
    %v536 = vadd.s32 %v530, %v524
    %v537 = vadd.s32 %v531, %v525
    %v538 = vadd.s32 %v532, %v526
    %539 = vrot.lane.b32.xlu0 %v533, 126
    %v540 = vpop.permute.xlu0 %539
    %541 = vrot.lane.b32.xlu0 %v534, 126
    %v542 = vpop.permute.xlu0 %541
    %543 = vrot.lane.b32.xlu0 %v535, 126
    %v544 = vpop.permute.xlu0 %543
    %545 = vrot.lane.b32.xlu0 %v536, 126
    %v546 = vpop.permute.xlu0 %545
    %547 = vrot.lane.b32.xlu0 %v537, 126
    %v548 = vpop.permute.xlu0 %547
    %549 = vrot.lane.b32.xlu0 %v538, 126
    %v550 = vpop.permute.xlu0 %549
    %v551 = vsel %vm157, %v540, %v542
    %v552 = vsel %vm157, %v544, %v546
    %v553 = vsel %vm157, %v548, %v550
    %554 = vst [vmem:[#allocation8 - $0x1] sm:$0xfe] %v551
    %555 = vst [vmem:[#allocation8 + $0x7] sm:$0xff] %v552
    %556 = vst [vmem:[#allocation8 + $0xf] sm:$0x1] %v553
    // Predicated region
    $region18: #{tpu_custom_call.1} parent=1 // pred_check
      _
    $region19: #{tpu_custom_call.1} parent=1 // pred_check_branch
      %558 = sbr.rel (0) target = $region21
    $region20: #{tpu_custom_call.1} parent=1 // pred_region
      %560 = vsyncadd [#allocation5], 0
      %s561 = sshll.u32 [#allocation8], 4
      %s562 = int_to_ptr.vmem [resolvable:$true] %s561
      %s563 = sshll.u32 %s2, 4
      %s564 = int_to_ptr.hbm [resolvable:$true] %s563
      %569 = dma.vmem_to_hbm [thread:$0]  %s562, 256, %s564, [#allocation5], 128, 128, 8
    $region21: #{tpu_custom_call.1} parent=1 // pred_fallthru
      _
    // Predicated region
    $region22: #{tpu_custom_call.1} parent=1 // pred_check
      _
    $region23: #{tpu_custom_call.1} parent=1 // pred_check_branch
      %571 = sbr.rel (0) target = $region25
    $region24: #{tpu_custom_call.1} parent=1 // pred_region
      %573 = dma.done [#allocation5], 256
    $region25: #{tpu_custom_call.1} parent=1 // pred_fallthru
      _
    %574 = vsyncpa [#allocation4], 1
    %575 = vsyncpa [#allocation7], 1
    %576 = vsyncpa [#allocation5], 1

</llo_original>
